<compile_context>
chip_gen: v5e
topology: v5e:2x2
jax: 0.10.0
libtpu: 0.0.40
codegen_flags: <defaults>
</compile_context>

<pallas_src>
import functools

import jax
import jax.numpy as jnp
from jax.experimental import pallas as pl
from jax.experimental.pallas import tpu as pltpu

_LANE = 128
_MAX_TILE_N = 2048                 # rows per grid step; sweep 1024/2048/4096
_VMEM_LIMIT = 32 * 1024 * 1024     # safe scoped-VMEM limit on v5e/v6e/v7x


def _round_up(x, m):
    return ((x + m - 1) // m) * m


def _compiler_params():
    return pltpu.CompilerParams(
        dimension_semantics=("parallel",),     # per-tile partial sums -> fully parallel
        vmem_limit_bytes=_VMEM_LIMIT)


def _shapes(B, T, V):
    N = B * T
    v_pad = _round_up(V, _LANE)
    tile_n = min(_MAX_TILE_N, _round_up(N, 8))
    n_pad = _round_up(N, tile_n)
    return N, v_pad, tile_n, n_pad


def _pad_table(table, v_pad):
    V = table.shape[0]
    # Padded rows are never indexed; padded columns are masked to -inf before
    # the logsumexp, so the loss is unbiased.
    return jnp.zeros((v_pad, v_pad), jnp.float32).at[:V, :V].set(
        table.astype(jnp.float32))


def _pad_column(x, N, n_pad):
    return jnp.zeros((n_pad, 1), jnp.int32).at[:N, 0].set(
        x.reshape(N).astype(jnp.int32))


def _lse_and_pick(logits, col, tgt, v_true):
    """Stable logsumexp over the true vocab + target-logit pick (fused)."""
    masked = jnp.where(col < v_true, logits, -jnp.inf)
    m = jnp.max(masked, axis=-1, keepdims=True)                  # (tile_n, 1)
    lse = m + jnp.log(jnp.sum(jnp.exp(masked - m), axis=-1, keepdims=True))
    picked = jnp.sum(jnp.where(col == tgt, logits, 0.0), axis=-1,
                     keepdims=True)
    return lse, picked


def _bigram_fused_kernel(idx_ref, tgt_ref, table_ref, logits_ref, part_ref,
                         *, n_true, v_true):
    """One grid step: this tile's logits + this tile's partial loss sum."""
    i = pl.program_id(0)
    tile_n, v_pad = logits_ref.shape

    idx = idx_ref[...]                                    # (tile_n, 1) int32
    tgt = tgt_ref[...]                                    # (tile_n, 1) int32

    # Single (1, V_pad) lane iota; all compares broadcast against (tile_n, 1).
    col = jax.lax.broadcasted_iota(jnp.int32, (1, v_pad), 1)

    # Embedding gather as a one-hot matmul on the MXU (exact 0/1 selectors).
    onehot = (col == idx).astype(jnp.float32)             # (tile_n, v_pad)
    logits = jnp.dot(onehot, table_ref[...],
                     preferred_element_type=jnp.float32)
    logits_ref[...] = logits                              # lane-dense store

    lse, picked = _lse_and_pick(logits, col, tgt, v_true)

    # Drop padded rows beyond the true N; one partial sum per tile.
    row = i * tile_n + jax.lax.broadcasted_iota(jnp.int32, (tile_n, 1), 0)
    part_ref[0, 0] = jnp.sum(jnp.where(row < n_true, lse - picked, 0.0))


def _bigram_loss_only_kernel(idx_ref, tgt_ref, table_ref, part_ref,
                             *, n_true, v_true):
    """Loss-only variant: no logits writeback at all."""
    i = pl.program_id(0)
    tile_n = idx_ref.shape[0]
    v_pad = table_ref.shape[1]

    idx = idx_ref[...]
    tgt = tgt_ref[...]

    col = jax.lax.broadcasted_iota(jnp.int32, (1, v_pad), 1)
    onehot = (col == idx).astype(jnp.float32)
    logits = jnp.dot(onehot, table_ref[...],
                     preferred_element_type=jnp.float32)

    lse, picked = _lse_and_pick(logits, col, tgt, v_true)

    row = i * tile_n + jax.lax.broadcasted_iota(jnp.int32, (tile_n, 1), 0)
    part_ref[0, 0] = jnp.sum(jnp.where(row < n_true, lse - picked, 0.0))


def _bigram_logits_kernel(idx_ref, table_ref, logits_ref):
    """Inference path: logits only, no cross-entropy work."""
    _, v_pad = logits_ref.shape
    col = jax.lax.broadcasted_iota(jnp.int32, (1, v_pad), 1)
    onehot = (col == idx_ref[...]).astype(jnp.float32)
    logits_ref[...] = jnp.dot(onehot, table_ref[...],
                              preferred_element_type=jnp.float32)


@functools.partial(jax.jit, static_argnames=("unpad_logits",))
def bigram_forward(idx, table, targets=None, *, unpad_logits=True):
    """idx: (B, T) int32, table: (V, V) f32, targets: (B, T) int32 or None.

    Returns (logits, loss).  logits are (B, T, V); with unpad_logits=False the
    padded (B, T, 128) slab is returned instead, skipping the extra HBM copy
    caused by the [:N, :V] slice.
    """
    B, T = idx.shape
    V = table.shape[0]
    N, v_pad, tile_n, n_pad = _shapes(B, T, V)
    grid = (n_pad // tile_n,)
    num_tiles = grid[0]

    table_p = _pad_table(table, v_pad)
    idx_col = _pad_column(idx, N, n_pad)

    tok_spec = pl.BlockSpec((tile_n, 1), lambda i: (i, 0))
    tab_spec = pl.BlockSpec((v_pad, v_pad), lambda i: (0, 0))
    logit_spec = pl.BlockSpec((tile_n, v_pad), lambda i: (i, 0))

    if targets is None:
        logits_flat = pl.pallas_call(
            _bigram_logits_kernel,
            grid=grid,
            in_specs=[tok_spec, tab_spec],
            out_specs=logit_spec,
            out_shape=jax.ShapeDtypeStruct((n_pad, v_pad), jnp.float32),
            compiler_params=_compiler_params(),
        )(idx_col, table_p)
        if unpad_logits:
            logits = logits_flat[:N, :V].reshape(B, T, V)
        else:
            logits = logits_flat[:N].reshape(B, T, v_pad)
        return logits, None

    tgt_col = _pad_column(targets, N, n_pad)

    logits_flat, partials = pl.pallas_call(
        functools.partial(_bigram_fused_kernel, n_true=N, v_true=V),
        grid=grid,
        in_specs=[tok_spec, tok_spec, tab_spec],
        out_specs=(
            logit_spec,
            pl.BlockSpec((1, 1), lambda i: (i, 0), memory_space=pltpu.SMEM),
        ),
        out_shape=(
            jax.ShapeDtypeStruct((n_pad, v_pad), jnp.float32),
            jax.ShapeDtypeStruct((num_tiles, 1), jnp.float32),
        ),
        compiler_params=_compiler_params(),
    )(idx_col, tgt_col, table_p)

    loss = jnp.sum(partials) / jnp.float32(N)   # tree-reduced in XLA
    if unpad_logits:
        logits = logits_flat[:N, :V].reshape(B, T, V)
    else:
        logits = logits_flat[:N].reshape(B, T, v_pad)
    return logits, loss


@jax.jit
def bigram_loss(idx, table, targets):
    """Cross-entropy loss only — skips the logits HBM writeback entirely."""
    B, T = idx.shape
    V = table.shape[0]
    N, v_pad, tile_n, n_pad = _shapes(B, T, V)
    grid = (n_pad // tile_n,)
    num_tiles = grid[0]

    table_p = _pad_table(table, v_pad)
    idx_col = _pad_column(idx, N, n_pad)
    tgt_col = _pad_column(targets, N, n_pad)

    tok_spec = pl.BlockSpec((tile_n, 1), lambda i: (i, 0))
    tab_spec = pl.BlockSpec((v_pad, v_pad), lambda i: (0, 0))

    partials = pl.pallas_call(
        functools.partial(_bigram_loss_only_kernel, n_true=N, v_true=V),
        grid=grid,
        in_specs=[tok_spec, tok_spec, tab_spec],
        out_specs=pl.BlockSpec((1, 1), lambda i: (i, 0),
                               memory_space=pltpu.SMEM),
        out_shape=jax.ShapeDtypeStruct((num_tiles, 1), jnp.float32),
        compiler_params=_compiler_params(),
    )(idx_col, tgt_col, table_p)
    return jnp.sum(partials) / jnp.float32(N)


def _reference(idx, table, targets):
    logits = table[idx]                                   # (B, T, V)
    B, T, V = logits.shape
    lg = logits.reshape(B * T, V)
    tg = targets.reshape(B * T)
    lse = jax.scipy.special.logsumexp(lg, axis=-1)
    picked = jnp.take_along_axis(lg, tg[:, None], axis=-1)[:, 0]
    return logits, jnp.mean(lse - picked)


if __name__ == "__main__":
    key = jax.random.PRNGKey(0)
    k_tab, k_idx, k_tgt = jax.random.split(key, 3)

    vocab_size = 65      # e.g. character vocab size
    B, T = 2, 8

    # nn.Embedding default init ~ N(0, 1)
    table = jax.random.normal(k_tab, (vocab_size, vocab_size), dtype=jnp.float32)
    idx = jax.random.randint(k_idx, (B, T), 0, vocab_size, dtype=jnp.int32)
    targets = jax.random.randint(k_tgt, (B, T), 0, vocab_size, dtype=jnp.int32)

    ref_logits, ref_loss = _reference(idx, table, targets)

    # Training path: logits + loss.
    logits, loss = bigram_forward(idx, table, targets)
    jax.block_until_ready((logits, loss))
    assert jnp.allclose(logits, ref_logits, atol=1e-5), "logits mismatch"
    assert jnp.allclose(loss, ref_loss, atol=1e-5), "loss mismatch"

    # Loss-only training-step path (no logits writeback at all).
    loss_only = bigram_loss(idx, table, targets)
    jax.block_until_ready(loss_only)
    assert jnp.allclose(loss_only, ref_loss, atol=1e-5), "loss-only mismatch"

    # Inference path (targets=None), matching the PyTorch forward contract.
    logits_only, no_loss = bigram_forward(idx, table, None)
    jax.block_until_ready(logits_only)
    assert no_loss is None
    assert jnp.allclose(logits_only, ref_logits, atol=1e-5), "inference logits mismatch"

    # Padded-vocab output contract (skips the post-kernel [:N, :V] slice copy).
    logits_pad, loss_pad = bigram_forward(idx, table, targets, unpad_logits=False)
    jax.block_until_ready((logits_pad, loss_pad))
    assert logits_pad.shape == (B, T, 128), "padded logits shape mismatch"
    assert jnp.allclose(logits_pad[..., :vocab_size], ref_logits, atol=1e-5), \
        "padded logits mismatch"
    assert jnp.allclose(loss_pad, ref_loss, atol=1e-5), "padded-path loss mismatch"

    print("KERNEL_OK")
</pallas_src>

<mosaic_0001>
module attributes {stable_mosaic.version = 11 : i64} {
  func.func @_bigram_fused_kernel(%arg0: i32, %arg1: memref<16x1xi32, #tpu.memory_space<vmem>>, %arg2: memref<16x1xi32, #tpu.memory_space<vmem>>, %arg3: memref<128x128xf32, #tpu.memory_space<vmem>>, %arg4: memref<16x128xf32, #tpu.memory_space<vmem>>, %arg5: memref<1x1xf32, #tpu.memory_space<smem>>) attributes {dimension_semantics = [#tpu.dimension_semantics<parallel>], iteration_bounds = array<i64: 1>, scalar_prefetch = 0 : i64, scratch_operands = 0 : i64, tpu.core_type = #tpu.core_type<tc>, window_params = [{transform_indices = @transform_0, window_bounds = array<i64: 16, 1>}, {transform_indices = @transform_1, window_bounds = array<i64: 16, 1>}, {pipeline_mode = #tpu.pipeline_mode<synchronous>, transform_indices = @transform_2, window_bounds = array<i64: 128, 128>}, {transform_indices = @transform_3, window_bounds = array<i64: 16, 128>}, {transform_indices = @transform_4, window_bounds = array<i64: 1, 1>}]} {
    %c0 = arith.constant 0 : index
    %c0_0 = arith.constant 0 : index
    %0 = vector.load %arg1[%c0, %c0_0] : memref<16x1xi32, #tpu.memory_space<vmem>>, vector<16x1xi32>
    %c0_1 = arith.constant 0 : index
    %c0_2 = arith.constant 0 : index
    %1 = vector.load %arg2[%c0_1, %c0_2] : memref<16x1xi32, #tpu.memory_space<vmem>>, vector<16x1xi32>
    %2 = tpu.iota {dimensions = array<i32: 1>} : vector<1x128xi32>
    %3 = vector.broadcast %2 : vector<1x128xi32> to vector<16x128xi32>
    %4 = vector.broadcast %0 : vector<16x1xi32> to vector<16x128xi32>
    %5 = arith.cmpi eq, %3, %4 : vector<16x128xi32>
    %6 = arith.extui %5 : vector<16x128xi1> to vector<16x128xi32>
    %7 = arith.sitofp %6 : vector<16x128xi32> to vector<16x128xf32>
    %c0_3 = arith.constant 0 : index
    %c0_4 = arith.constant 0 : index
    %8 = vector.load %arg3[%c0_3, %c0_4] : memref<128x128xf32, #tpu.memory_space<vmem>>, vector<128x128xf32>
    %cst = arith.constant dense<0.000000e+00> : vector<16x128xf32>
    %9 = tpu.matmul %7, %8, %cst {dimension_numbers = #tpu.dot_dimension_numbers<[1], [0], [0], [1], [0, 0, 1, 1], [], []>} : vector<16x128xf32>, vector<128x128xf32>, vector<16x128xf32> -> vector<16x128xf32>
    %c0_5 = arith.constant 0 : index
    %c0_6 = arith.constant 0 : index
    %10 = vector.load %arg4[%c0_5, %c0_6] : memref<16x128xf32, #tpu.memory_space<vmem>>, vector<16x128xf32>
    tpu.vector_store %arg4[%c0_5, %c0_6], %9 {strides = array<i32>} : memref<16x128xf32, #tpu.memory_space<vmem>>, vector<16x128xf32>,
    %c65_i32 = arith.constant 65 : i32
    %11 = vector.broadcast %c65_i32 : i32 to vector<1x128xi32>
    %12 = arith.cmpi slt, %2, %11 : vector<1x128xi32>
    %cst_7 = arith.constant 0xFF800000 : f32
    %13 = vector.shape_cast %12 : vector<1x128xi1> to vector<1x128xi1>
    %14 = vector.broadcast %13 : vector<1x128xi1> to vector<16x128xi1>
    %15 = vector.broadcast %cst_7 : f32 to vector<16x128xf32>
    %16 = arith.select %14, %9, %15 : vector<16x128xi1>, vector<16x128xf32>
    %cst_8 = arith.constant dense<0xFF800000> : vector<16xf32>
    %17 = vector.multi_reduction <maximumf>, %16, %cst_8 [1] : vector<16x128xf32> to vector<16xf32>
    %18 = vector.shape_cast %17 : vector<16xf32> to vector<16x1xf32>
    %19 = vector.broadcast %18 : vector<16x1xf32> to vector<16x128xf32>
    %20 = arith.subf %16, %19 : vector<16x128xf32>
    %21 = math.exp %20 : vector<16x128xf32>
    %cst_9 = arith.constant dense<0.000000e+00> : vector<16xf32>
    %22 = vector.multi_reduction <add>, %21, %cst_9 [1] : vector<16x128xf32> to vector<16xf32>
    %23 = vector.shape_cast %22 : vector<16xf32> to vector<16x1xf32>
    %24 = math.log %23 : vector<16x1xf32>
    %25 = arith.addf %18, %24 : vector<16x1xf32>
    %26 = vector.broadcast %2 : vector<1x128xi32> to vector<16x128xi32>
    %27 = vector.broadcast %1 : vector<16x1xi32> to vector<16x128xi32>
    %28 = arith.cmpi eq, %26, %27 : vector<16x128xi32>
    %cst_10 = arith.constant 0.000000e+00 : f32
    %29 = vector.broadcast %cst_10 : f32 to vector<16x128xf32>
    %30 = arith.select %28, %9, %29 : vector<16x128xi1>, vector<16x128xf32>
    %cst_11 = arith.constant dense<0.000000e+00> : vector<16xf32>
    %31 = vector.multi_reduction <add>, %30, %cst_11 [1] : vector<16x128xf32> to vector<16xf32>
    %32 = vector.shape_cast %31 : vector<16xf32> to vector<16x1xf32>
    %c16_i32 = arith.constant 16 : i32
    %33 = arith.muli %arg0, %c16_i32 : i32
    %34 = tpu.iota {dimensions = array<i32: 0>} : vector<16x1xi32>
    %35 = vector.broadcast %33 : i32 to vector<16x1xi32>
    %36 = arith.addi %35, %34 : vector<16x1xi32>
    %c16_i32_12 = arith.constant 16 : i32
    %37 = vector.broadcast %c16_i32_12 : i32 to vector<16x1xi32>
    %38 = arith.cmpi slt, %36, %37 : vector<16x1xi32>
    %39 = arith.subf %25, %32 : vector<16x1xf32>
    %cst_13 = arith.constant 0.000000e+00 : f32
    %40 = vector.broadcast %cst_13 : f32 to vector<16x1xf32>
    %41 = arith.select %38, %39, %40 : vector<16x1xi1>, vector<16x1xf32>
    %42 = vector.shape_cast %41 : vector<16x1xf32> to vector<1x16x1xf32>
    %cst_14 = arith.constant dense<0.000000e+00> : vector<1xf32>
    %43 = vector.multi_reduction <add>, %42, %cst_14 [1, 2] : vector<1x16x1xf32> to vector<1xf32>
    %44 = vector.shape_cast %43 : vector<1xf32> to vector<1x1x1xf32>
    %45 = vector.extract %44[0, 0, 0] : f32 from vector<1x1x1xf32>
    %c0_15 = arith.constant 0 : index
    %c0_16 = arith.constant 0 : index
    %46 = memref.load %arg5[%c0_15, %c0_16] : memref<1x1xf32, #tpu.memory_space<smem>>
    memref.store %45, %arg5[%c0_15, %c0_16] : memref<1x1xf32, #tpu.memory_space<smem>>
    return
  }
  func.func @transform_0(%arg0: i32) -> (i32, i32) {
    %c0_i32 = arith.constant 0 : i32
    %c0_i32_0 = arith.constant 0 : i32
    return %arg0, %c0_i32 : i32, i32
  }
  func.func @transform_1(%arg0: i32) -> (i32, i32) {
    %c0_i32 = arith.constant 0 : i32
    %c0_i32_0 = arith.constant 0 : i32
    return %arg0, %c0_i32 : i32, i32
  }
  func.func @transform_2(%arg0: i32) -> (i32, i32) {
    %c0_i32 = arith.constant 0 : i32
    %c0_i32_0 = arith.constant 0 : i32
    %c0_i32_1 = arith.constant 0 : i32
    return %c0_i32, %c0_i32_0 : i32, i32
  }
  func.func @transform_3(%arg0: i32) -> (i32, i32) {
    %c0_i32 = arith.constant 0 : i32
    %c0_i32_0 = arith.constant 0 : i32
    return %arg0, %c0_i32 : i32, i32
  }
  func.func @transform_4(%arg0: i32) -> (i32, i32) {
    %c0_i32 = arith.constant 0 : i32
    %c0_i32_0 = arith.constant 0 : i32
    return %arg0, %c0_i32 : i32, i32
  }
}

</mosaic_0001>

<llo_original>
// kernel: bigram_forward.1
$region0: #{bigram_forward.1}
  #allocation0 [shape = 'u32[]', space=smem, size = 0x4, offset = 0x4, fixed_abs, tag = 'smem constant byte address 0x4 - core index']
  #allocation1 [shape = 'u32[72,128]{1,0:T(1,128)}', space=vmem, size = 0x9000, scoped, tag = 'internal scratch']
  %s0 = inlined_call_operand.vmem [shape: s32[16,1], index: 0, kind: input, shape index: {}]
  %s1 = inlined_call_operand.vmem [shape: s32[16,1], index: 1, kind: input, shape index: {}]
  %s2 = inlined_call_operand.vmem [shape: f32[128,128], index: 2, kind: input, shape index: {}]
  %s3 = inlined_call_operand.vmem [shape: f32[16,128], index: 3, kind: output, shape index: {0}]
  %s4 = inlined_call_operand.hbm [shape: f32[1,1], index: 4, kind: output, shape index: {1}]
  %5 = xla_tuple %s3, %s4
  %s6 = sld [smem:[#allocation0]]
  $region30: #{bigram_forward.1} parent=0
    _
  %s8 = ssub.s32 1, %s6
  %s9 = scalar_select 0, %s8, %s6
  $region1: #{bigram_forward.1} parent=0
    #allocation2 [shape = 'u8[512]{0}', space=smem, size = 0x200, scoped, tag = 'output window, operand 1, single buffered']
    #allocation3 [shape = 's32[1]{0}', space=sflag, size = 0x4, scoped, tag = 'scoped memory for bigram_forward.1']
    %10 = vsyncpa [#allocation3], 0
    // Predicated region
    $region2: #{bigram_forward.1} parent=1 // pred_check
      _
    $region3: #{bigram_forward.1} parent=1 // pred_check_branch
      %12 = sbr.rel (0) target = $region5
    $region4: #{bigram_forward.1} parent=1 // pred_region
      _
    $region5: #{bigram_forward.1} parent=1 // pred_fallthru
      _
    // Predicated region
    $region6: #{bigram_forward.1} parent=1 // pred_check
      _
    $region7: #{bigram_forward.1} parent=1 // pred_check_branch
      %14 = sbr.rel (0) target = $region9
    $region8: #{bigram_forward.1} parent=1 // pred_region
      _
    $region9: #{bigram_forward.1} parent=1 // pred_fallthru
      _
    // Predicated region
    $region10: #{bigram_forward.1} parent=1 // pred_check
      _
    $region11: #{bigram_forward.1} parent=1 // pred_check_branch
      %16 = sbr.rel (0) target = $region13
    $region12: #{bigram_forward.1} parent=1 // pred_region
      _
    $region13: #{bigram_forward.1} parent=1 // pred_fallthru
      _
    %v17 = vld [vmem:[%s0] sm:$0xff]
    %v18 = vld [vmem:[%s0 + $0x8] sm:$0xff]
    %v19 = vld [vmem:[%s1] sm:$0xff]
    %v20 = vld [vmem:[%s1 + $0x8] sm:$0xff]
    %v21 = vlaneseq
    %v22 = vand.u32 %v21, 127
    %23 = vset.pattern.permute.xlu0 0
    %24 = vperm.xlu0 %23, %v17
    %v25 = vpop.permute.xlu0 %24
    %26 = vset.pattern.permute.xlu0 0
    %27 = vperm.xlu0 %26, %v18
    %v28 = vpop.permute.xlu0 %27
    %vm29 = vcmp.eq.s32.totalorder %v22, %v25
    %vm30 = vcmp.eq.s32.totalorder %v22, %v28
    %v31 = vsel %vm29, 1, 0
    %v32 = vsel %vm30, 1, 0
    %v33 = vcvt.s32.f32 %v31
    %v34 = vcvt.s32.f32 %v32
    %v35 = vld [vmem:[%s2] sm:$0xff]
    %v36 = vld [vmem:[%s2 + $0x8] sm:$0xff]
    %v37 = vld [vmem:[%s2 + $0x10] sm:$0xff]
    %v38 = vld [vmem:[%s2 + $0x18] sm:$0xff]
    %v39 = vld [vmem:[%s2 + $0x20] sm:$0xff]
    %v40 = vld [vmem:[%s2 + $0x28] sm:$0xff]
    %v41 = vld [vmem:[%s2 + $0x30] sm:$0xff]
    %v42 = vld [vmem:[%s2 + $0x38] sm:$0xff]
    %v43 = vld [vmem:[%s2 + $0x40] sm:$0xff]
    %v44 = vld [vmem:[%s2 + $0x48] sm:$0xff]
    %v45 = vld [vmem:[%s2 + $0x50] sm:$0xff]
    %v46 = vld [vmem:[%s2 + $0x58] sm:$0xff]
    %v47 = vld [vmem:[%s2 + $0x60] sm:$0xff]
    %v48 = vld [vmem:[%s2 + $0x68] sm:$0xff]
    %v49 = vld [vmem:[%s2 + $0x70] sm:$0xff]
    %v50 = vld [vmem:[%s2 + $0x78] sm:$0xff]
    %51 = vmatpush.msra.mxu0 %v50
    %52 = vmatpush.msra.mxu0 %v49
    %53 = vmatpush.msra.mxu0 %v48
    %54 = vmatpush.msra.mxu0 %v47
    %55 = vmatpush.msra.mxu0 %v46
    %56 = vmatpush.msra.mxu0 %v45
    %57 = vmatpush.msra.mxu0 %v44
    %58 = vmatpush.msra.mxu0 %v43
    %59 = vmatpush.msra.mxu0 %v42
    %60 = vmatpush.msra.mxu0 %v41
    %61 = vmatpush.msra.mxu0 %v40
    %62 = vmatpush.msra.mxu0 %v39
    %63 = vmatpush.msra.mxu0 %v38
    %64 = vmatpush.msra.mxu0 %v37
    %65 = vmatpush.msra.mxu0 %v36
    %66 = vmatpush.msra.mxu0 %v35
    %67 = vmatmul.f32.gmra.mxu0 %v33
    %v68 = vpop.f32.mrf.mxu0
    %v69 = vadd.f32 0.0, %v68
    %70 = vmatmul.f32.gmra.mxu0 %v34
    %v71 = vpop.f32.mrf.mxu0
    %v72 = vadd.f32 0.0, %v71
    %73 = vdwg.mxu0
    %74 = vst [vmem:[%s3] sm:$0xff] %v69
    %75 = vst [vmem:[%s3 + $0x8] sm:$0xff] %v72
    %vm76 = vcmp.lt.s32.totalorder %v22, 65
    %v77 = vsel %vm76, 1, 0
    %vm78 = vcmp.eq.s32.totalorder %v77, 1
    %v79 = vsel %vm78, %v69, -inf
    %v80 = vsel %vm78, %v72, -inf
    %81 = vmax.xlane.f32.xlu0 %v79
    %v82 = vpop.xlane.xlu0 %81
    %83 = vmax.xlane.f32.xlu0 %v80
    %v84 = vpop.xlane.xlu0 %83
    %v85 = vsub.f32 %v79, %v82
    %v86 = vsub.f32 %v80, %v84
    %v87 = vmul.f32 %v85, 1.442695
    %v88 = vpow.pop %v87
    %v89 = vmul.f32 %v86, 1.442695
    %v90 = vpow.pop %v89
    %91 = vadd.xlane.f32.xlu0 %v88
    %v92 = vpop.xlane.xlu0 %91
    %93 = vadd.xlane.f32.xlu0 %v90
    %v94 = vpop.xlane.xlu0 %93
    %v95 = vlog2.pop %v92
    %v96 = vmul.f32 %v95, 0.6931472
    %v97 = vlog2.pop %v94
    %v98 = vmul.f32 %v97, 0.6931472
    %v99 = vadd.f32 %v82, %v96
    %v100 = vadd.f32 %v84, %v98
    %101 = vset.pattern.permute.xlu0 0
    %102 = vperm.xlu0 %101, %v19
    %v103 = vpop.permute.xlu0 %102
    %104 = vset.pattern.permute.xlu0 0
    %105 = vperm.xlu0 %104, %v20
    %v106 = vpop.permute.xlu0 %105
    %vm107 = vcmp.eq.s32.totalorder %v22, %v103
    %vm108 = vcmp.eq.s32.totalorder %v22, %v106
    %v109 = vsel %vm107, %v69, 0.0
    %v110 = vsel %vm108, %v72, 0.0
    %111 = vadd.xlane.f32.xlu0 %v109
    %v112 = vpop.xlane.xlu0 %111
    %113 = vadd.xlane.f32.xlu0 %v110
    %v114 = vpop.xlane.xlu0 %113
    %s115 = smul.u32 0, 16
    %v116 = vlaneseq
    %v117 = vshrl.u32 %v116, 7
    %v118 = vadd.s32 %v117, 8
    %v119 = vstv %s115
    %v120 = vadd.s32 %v119, %v117
    %v121 = vadd.s32 %v119, %v118
    %vm122 = vcmp.lt.s32.totalorder %v120, 16
    %vm123 = vcmp.lt.s32.totalorder %v121, 16
    %v124 = vsub.f32 %v99, %v112
    %v125 = vsub.f32 %v100, %v114
    %v126 = vsel %vm122, %v124, 0.0
    %v127 = vsel %vm123, %v125, 0.0
    %vm128 = vcmask 7168
    %v129 = vsel %vm128, %v126, 0.0
    %v130 = vsel %vm128, %v127, 0.0
    %v131 = vadd.f32 %v129, %v130
    %132 = vadd.xlane.f32.xlu0 %v131
    %v133 = vpop.xlane.xlu0 %132
    %v134 = vrot.slane %v133, 4
    %v135 = vadd.f32 %v133, %v134
    %v136 = vrot.slane %v135, 2
    %v137 = vadd.f32 %v135, %v136
    %v138 = vrot.slane %v137, 1
    %v139 = vadd.f32 %v137, %v138
    %s140 = vtos %v139
    %s141 = scalar_lea.smem [#allocation2], 0
    %142 = sst [smem:[%s141]] %s140
    // Predicated region
    $region14: #{bigram_forward.1} parent=1 // pred_check
      _
    $region15: #{bigram_forward.1} parent=1 // pred_check_branch
      %144 = sbr.rel (0) target = $region17
    $region16: #{bigram_forward.1} parent=1 // pred_region
      _
    $region17: #{bigram_forward.1} parent=1 // pred_fallthru
      _
    // Predicated region
    $region18: #{bigram_forward.1} parent=1 // pred_check
      _
    $region19: #{bigram_forward.1} parent=1 // pred_check_branch
      %146 = sbr.rel (0) target = $region21
    $region20: #{bigram_forward.1} parent=1 // pred_region
      %148 = vsyncadd [#allocation3], 0
      %s150 = sshll.u32 %s4, 4
      %s151 = int_to_ptr.hbm [resolvable:$true] %s150
      %153 = dma.smem_to_hbm [#allocation2], 16, %s151, [#allocation3]
    $region21: #{bigram_forward.1} parent=1 // pred_fallthru
      _
    // Predicated region
    $region22: #{bigram_forward.1} parent=1 // pred_check
      _
    $region23: #{bigram_forward.1} parent=1 // pred_check_branch
      %155 = sbr.rel (0) target = $region25
    $region24: #{bigram_forward.1} parent=1 // pred_region
      _
    $region25: #{bigram_forward.1} parent=1 // pred_fallthru
      _
    // Predicated region
    $region26: #{bigram_forward.1} parent=1 // pred_check
      _
    $region27: #{bigram_forward.1} parent=1 // pred_check_branch
      %157 = sbr.rel (0) target = $region29
    $region28: #{bigram_forward.1} parent=1 // pred_region
      %159 = dma.done [#allocation3], 16
    $region29: #{bigram_forward.1} parent=1 // pred_fallthru
      _
    %160 = sfence
    %161 = vsyncpa [#allocation3], 1

</llo_original>
